<compile_context>
chip_gen: v5e
topology: v5e:2x2
jax: 0.10.0
libtpu: 0.0.40
codegen_flags: <defaults>
</compile_context>

<pallas_src>
import jax
import jax.numpy as jnp
from jax.experimental import pallas as pl
from jax.experimental.pallas import tpu as pltpu


# ----------------------------------------------------------------------------
# Kernel: elementwise x * sigmoid(x) on one (row_tile, lane) VMEM block.
# ----------------------------------------------------------------------------
def _silu_kernel(x_ref, o_ref):
    x = x_ref[...].astype(jnp.float32)
    # exp and reciprocal both issue on the otherwise-idle EUP slot.
    sig = pl.reciprocal(1.0 + jnp.exp(-x), approx=False)
    o_ref[...] = (x * sig).astype(o_ref.dtype)


# ----------------------------------------------------------------------------
# Layout / tiling helpers.
# ----------------------------------------------------------------------------
def _flatten_lane_dense(shape):
    """Return (rows, lane) slab shape; lane-dense (128) when total allows."""
    total = 1
    for d in shape:
        total *= d
    if total % 128 == 0:
        return total // 128, 128
    # Fallback for odd sizes: keep the original last dim on lanes.
    return total // shape[-1], shape[-1]


def _pick_row_tile(rows, lane, itemsize, max_block_bytes=2 << 20):
    """Largest legal row tile whose block stays under max_block_bytes.

    A partial tile must have its sublane dim divisible by 8 (the (8,128)
    constraint); a full-extent block is always legal.
    """
    max_rows = max(1, max_block_bytes // (lane * itemsize))
    if rows <= max_rows:
        return rows  # single block, full extent
    best = None
    d = 1
    while d * d <= rows:
        if rows % d == 0:
            for cand in (d, rows // d):
                if cand <= max_rows and cand % 8 == 0:
                    if best is None or cand > best:
                        best = cand
        d += 1
    if best is None:
        # TODO(synk): pad rows to a multiple of 8 instead of one giant block
        # for pathological shapes; full extent is correct but VMEM-heavy.
        return rows
    return best


# ----------------------------------------------------------------------------
# Wrapper: Lambda(fn) with fn(x) = x * sigmoid(x); arbitrary shape in/out.
# ----------------------------------------------------------------------------
def lambda_silu(x: jax.Array) -> jax.Array:
    orig_shape = x.shape
    rows, lane = _flatten_lane_dense(orig_shape)
    x2d = x.reshape(rows, lane)  # pure glue reshape, no data reordering

    row_tile = _pick_row_tile(rows, lane, x.dtype.itemsize)
    grid = (rows // row_tile,)

    out2d = pl.pallas_call(
        _silu_kernel,
        out_shape=jax.ShapeDtypeStruct((rows, lane), x.dtype),
        grid_spec=pltpu.PrefetchScalarGridSpec(
            num_scalar_prefetch=0,
            grid=grid,
            in_specs=[pl.BlockSpec((row_tile, lane), lambda i: (i, 0))],
            out_specs=pl.BlockSpec((row_tile, lane), lambda i: (i, 0)),
        ),
        compiler_params=pltpu.CompilerParams(
            dimension_semantics=("parallel",)
        ),
    )(x2d)

    return out2d.reshape(orig_shape)


# Mirror of the PyTorch module: Lambda(fn).forward(*args) == fn(*args).
class Lambda:
    def __init__(self, fn):
        self.fn = fn

    def __call__(self, *args):
        return self.fn(*args)


if __name__ == "__main__":
    key = jax.random.PRNGKey(0)
    x = jax.random.normal(key, (2, 4, 16, 16), dtype=jnp.float32)

    module = Lambda(lambda_silu)          # Lambda wrapping the Pallas-backed fn
    out = module(x)
    out = jax.block_until_ready(out)

    # sanity check against plain-JAX reference of the same fn
    ref = x * jax.nn.sigmoid(x)
    assert out.shape == x.shape and out.dtype == x.dtype
    assert jnp.max(jnp.abs(out - ref)) < 1e-5

    print("KERNEL_OK")
</pallas_src>

<mosaic_0001>
module attributes {stable_mosaic.version = 11 : i64} {
  func.func @_silu_kernel(%arg0: i32, %arg1: memref<16x128xf32, #tpu.memory_space<vmem>>, %arg2: memref<16x128xf32, #tpu.memory_space<vmem>>) attributes {dimension_semantics = [#tpu.dimension_semantics<parallel>], iteration_bounds = array<i64: 1>, scalar_prefetch = 0 : i64, scratch_operands = 0 : i64, tpu.core_type = #tpu.core_type<tc>, window_params = [{transform_indices = @transform_0, window_bounds = array<i64: 16, 128>}, {transform_indices = @transform_1, window_bounds = array<i64: 16, 128>}]} {
    %c0 = arith.constant 0 : index
    %c0_0 = arith.constant 0 : index
    %0 = vector.load %arg1[%c0, %c0_0] : memref<16x128xf32, #tpu.memory_space<vmem>>, vector<16x128xf32>
    %cst = arith.constant 0.000000e+00 : f32
    %1 = vector.broadcast %cst : f32 to vector<16x128xf32>
    %2 = arith.subf %1, %0 : vector<16x128xf32>
    %3 = math.exp %2 : vector<16x128xf32>
    %cst_1 = arith.constant 1.000000e+00 : f32
    %4 = vector.broadcast %cst_1 : f32 to vector<16x128xf32>
    %5 = arith.addf %4, %3 : vector<16x128xf32>
    %6 = tpu.reciprocal %5 : vector<16x128xf32> -> vector<16x128xf32>
    %7 = arith.mulf %0, %6 : vector<16x128xf32>
    %c0_2 = arith.constant 0 : index
    %c0_3 = arith.constant 0 : index
    %8 = vector.load %arg2[%c0_2, %c0_3] : memref<16x128xf32, #tpu.memory_space<vmem>>, vector<16x128xf32>
    tpu.vector_store %arg2[%c0_2, %c0_3], %7 {strides = array<i32>} : memref<16x128xf32, #tpu.memory_space<vmem>>, vector<16x128xf32>,
    return
  }
  func.func @transform_0(%arg0: i32) -> (i32, i32) {
    %c0_i32 = arith.constant 0 : i32
    %c0_i32_0 = arith.constant 0 : i32
    return %arg0, %c0_i32 : i32, i32
  }
  func.func @transform_1(%arg0: i32) -> (i32, i32) {
    %c0_i32 = arith.constant 0 : i32
    %c0_i32_0 = arith.constant 0 : i32
    return %arg0, %c0_i32 : i32, i32
  }
}

</mosaic_0001>

<llo_original>
// kernel: tpu_custom_call.1
$region0: #{tpu_custom_call.1}
  #allocation0 [shape = 'u32[]', space=smem, size = 0x4, offset = 0x4, fixed_abs, tag = 'smem constant byte address 0x4 - core index']
  #allocation1 [shape = 'u32[72,128]{1,0:T(1,128)}', space=vmem, size = 0x9000, scoped, tag = 'internal scratch']
  %s0 = inlined_call_operand.hbm [shape: f32[16,128], index: 0, kind: input, shape index: {}]
  %s1 = inlined_call_operand.hbm [shape: f32[16,128], index: 1, kind: output, shape index: {}]
  %s2 = sld [smem:[#allocation0]]
  $region18: #{tpu_custom_call.1} parent=0
    _
  %s4 = ssub.s32 1, %s2
  %s5 = scalar_select 0, %s4, %s2
  $region1: #{tpu_custom_call.1} parent=0
    #allocation2 [shape = 'u8[8192]{0}', space=vmem, size = 0x2000, scoped, tag = 'input window, operand 0, single buffered']
    #allocation3 [shape = 's32[1]{0}', space=sflag, size = 0x4, scoped, tag = 'scoped memory for tpu_custom_call.1']
    #allocation4 [shape = 's32[1]{0}', space=sflag, size = 0x4, scoped, tag = 'scoped memory for tpu_custom_call.1']
    #allocation5 [shape = 'u8[8192]{0}', space=vmem, size = 0x2000, scoped, tag = 'output window, operand 0, single buffered']
    %6 = vsyncpa [#allocation3], 0
    %7 = vsyncpa [#allocation4], 0
    // Predicated region
    $region2: #{tpu_custom_call.1} parent=1 // pred_check
      _
    $region3: #{tpu_custom_call.1} parent=1 // pred_check_branch
      %9 = sbr.rel (0) target = $region5
    $region4: #{tpu_custom_call.1} parent=1 // pred_region
      %11 = vsyncadd [#allocation3], 0
      %s12 = sshll.u32 %s0, 4
      %s13 = int_to_ptr.hbm [resolvable:$true] %s12
      %s14 = sshll.u32 [#allocation2], 4
      %s15 = int_to_ptr.vmem [resolvable:$true] %s14
      %20 = dma.hbm_to_vmem [thread:$0]  %s13, 256, %s15, [#allocation3], 128, 128, 8
    $region5: #{tpu_custom_call.1} parent=1 // pred_fallthru
      _
    // Predicated region
    $region6: #{tpu_custom_call.1} parent=1 // pred_check
      _
    $region7: #{tpu_custom_call.1} parent=1 // pred_check_branch
      %22 = sbr.rel (0) target = $region9
    $region8: #{tpu_custom_call.1} parent=1 // pred_region
      %24 = dma.done [#allocation3], 256
    $region9: #{tpu_custom_call.1} parent=1 // pred_fallthru
      _
    %v25 = vld [vmem:[#allocation2] sm:$0xff]
    %v26 = vld [vmem:[#allocation2 + $0x8] sm:$0xff]
    %v27 = vsub.f32 0.0, %v25
    %v28 = vsub.f32 0.0, %v26
    %v29 = vmul.f32 %v27, 1.442695
    %v30 = vpow.pop %v29
    %v31 = vmul.f32 %v28, 1.442695
    %v32 = vpow.pop %v31
    %v33 = vadd.f32 %v30, 1.0
    %v34 = vadd.f32 %v32, 1.0
    %v35 = vrcp.pop %v33
    %v36 = vmul.f32 %v33, %v35
    %v37 = vsub.f32 1.0, %v36
    %v38 = vmul.f32 %v35, %v37
    %v39 = vadd.f32 %v35, %v38
    %vm40 = vweird.f32 %v33
    %vm41 = vweird.f32 %v35
    %vm42 = vmor %vm40, %vm41
    %v43 = vsel %vm42, %v35, %v39
    %v44 = vand.u32 2147483647, %v33
    %vm45 = vcmp.eq.f32.partialorder %v44, 8.507059e+37
    %v46 = vand.u32 %v33, 2147483648
    %v47 = vor.u32 1.1754944e-38, %v46
    %v48 = vsel %vm45, %v47, %v43
    %v49 = vrcp.pop %v34
    %v50 = vmul.f32 %v34, %v49
    %v51 = vsub.f32 1.0, %v50
    %v52 = vmul.f32 %v49, %v51
    %v53 = vadd.f32 %v49, %v52
    %vm54 = vweird.f32 %v34
    %vm55 = vweird.f32 %v49
    %vm56 = vmor %vm54, %vm55
    %v57 = vsel %vm56, %v49, %v53
    %v58 = vand.u32 2147483647, %v34
    %vm59 = vcmp.eq.f32.partialorder %v58, 8.507059e+37
    %v60 = vand.u32 %v34, 2147483648
    %v61 = vor.u32 1.1754944e-38, %v60
    %v62 = vsel %vm59, %v61, %v57
    %v63 = vmul.f32 %v25, %v48
    %v64 = vmul.f32 %v26, %v62
    %65 = vst [vmem:[#allocation5] sm:$0xff] %v63
    %66 = vst [vmem:[#allocation5 + $0x8] sm:$0xff] %v64
    // Predicated region
    $region10: #{tpu_custom_call.1} parent=1 // pred_check
      _
    $region11: #{tpu_custom_call.1} parent=1 // pred_check_branch
      %68 = sbr.rel (0) target = $region13
    $region12: #{tpu_custom_call.1} parent=1 // pred_region
      %70 = vsyncadd [#allocation4], 0
      %s71 = sshll.u32 [#allocation5], 4
      %s72 = int_to_ptr.vmem [resolvable:$true] %s71
      %s73 = sshll.u32 %s1, 4
      %s74 = int_to_ptr.hbm [resolvable:$true] %s73
      %79 = dma.vmem_to_hbm [thread:$0]  %s72, 256, %s74, [#allocation4], 128, 128, 8
    $region13: #{tpu_custom_call.1} parent=1 // pred_fallthru
      _
    // Predicated region
    $region14: #{tpu_custom_call.1} parent=1 // pred_check
      _
    $region15: #{tpu_custom_call.1} parent=1 // pred_check_branch
      %81 = sbr.rel (0) target = $region17
    $region16: #{tpu_custom_call.1} parent=1 // pred_region
      %83 = dma.done [#allocation4], 256
    $region17: #{tpu_custom_call.1} parent=1 // pred_fallthru
      _
    %84 = vsyncpa [#allocation3], 1
    %85 = vsyncpa [#allocation4], 1

</llo_original>
